<compile_context>
chip_gen: v6e
topology: v6e:2x2x1
jax: 0.10.0
libtpu: 0.0.40
codegen_flags: <defaults>
</compile_context>

<pallas_src>
import functools

import jax
import jax.numpy as jnp
from jax.experimental import pallas as pl
from jax.experimental.pallas import tpu as pltpu


def _round_up(x, m):
    return (x + m - 1) // m * m


def _coupling_kernel(c_in, reverse, *refs):
    # Everything inside the kernel is in (features, batch) layout:
    #   z_ref      : (c_in, TB)      f32
    #   mask_ref   : (c_in, 1)       f32  (broadcasts over the batch lanes)
    #   ldj_ref    : (1, TB)         f32  (forward only)
    #   w1         : (n_hidden, c_in)        compute dtype
    #   w2         : (n_hidden, n_hidden)    compute dtype
    #   w3         : (2*c_in, n_hidden)      compute dtype (fused h/t head)
    #   b1, b2, b3 : (out, 1)        f32
    if reverse:
        (z_ref, mask_ref,
         w1_ref, b1_ref, w2_ref, b2_ref, w3_ref, b3_ref,
         z_out_ref) = refs
        ldj_ref = ldj_out_ref = None
    else:
        (z_ref, mask_ref, ldj_ref,
         w1_ref, b1_ref, w2_ref, b2_ref, w3_ref, b3_ref,
         z_out_ref, ldj_out_ref) = refs

    z = z_ref[...]                      # (c_in, TB)
    mask = mask_ref[...]                # (c_in, 1)
    cdt = w1_ref.dtype                  # matmul compute dtype (bf16 or f32)

    x = (mask * z).astype(cdt)

    # 3-layer MLP, computed as W @ X so batch stays on the lane axis.
    h1 = jnp.maximum(
        jnp.dot(w1_ref[...], x, preferred_element_type=jnp.float32)
        + b1_ref[...], 0.0)                                    # (n_hidden, TB)
    h2 = jnp.maximum(
        jnp.dot(w2_ref[...], h1.astype(cdt), preferred_element_type=jnp.float32)
        + b2_ref[...], 0.0)                                    # (n_hidden, TB)
    y = (jnp.dot(w3_ref[...], h2.astype(cdt), preferred_element_type=jnp.float32)
         + b3_ref[...])                                        # (2*c_in, TB)

    log_scale = jnp.tanh(y[:c_in, :])                          # (c_in, TB)
    t = y[c_in:, :]                                            # (c_in, TB)
    inv = 1.0 - mask

    if not reverse:
        z_new = mask * z + inv * (z * jnp.exp(log_scale) + t)
        ldj_out_ref[...] = (ldj_ref[...]
                            + jnp.sum(inv * log_scale, axis=0, keepdims=True)
                            ).astype(ldj_out_ref.dtype)
    else:
        z_new = mask * z + inv * (z - t) * jnp.exp(-log_scale)

    z_out_ref[...] = z_new.astype(z_out_ref.dtype)


def coupling_forward(params, z, ldj, mask, reverse=False, *,
                     block_batch=512, compute_dtype=jnp.bfloat16):
    """Pallas implementation of Coupling.forward(z, ldj, reverse).

    z: (B, c_in), ldj: (B,), mask: (c_in,).  Returns (z_new, ldj_new).
    """
    B, c_in = z.shape
    out_dtype = z.dtype

    # Lane-dense layout: batch on the lane (last) axis.
    zt = jnp.transpose(z).astype(jnp.float32)                  # (c_in, B)
    mask_col = jnp.reshape(mask, (c_in, 1)).astype(jnp.float32)

    # Batch tile: multiple of 128 lanes; pad B so the grid divides evenly.
    TB = max(128, min(int(block_batch), _round_up(B, 128)))
    B_pad = _round_up(B, TB)
    if B_pad != B:
        zt = jnp.pad(zt, ((0, 0), (0, B_pad - B)))
    grid = (B_pad // TB,)

    # Cast weights to the matmul compute dtype once, outside the kernel.
    cdt = jnp.dtype(compute_dtype)
    w1 = params['w1'].astype(cdt)
    w2 = params['w2'].astype(cdt)
    w3 = params['w3'].astype(cdt)
    b1 = params['b1'].astype(jnp.float32)
    b2 = params['b2'].astype(jnp.float32)
    b3 = params['b3'].astype(jnp.float32)
    weight_args = (w1, b1, w2, b2, w3, b3)

    def tile_spec(rows):
        # Per-grid-step batch tile.
        return pl.BlockSpec((rows, TB), lambda i: (0, i))

    def resident_spec(a):
        # Full array, constant block index -> stays resident in VMEM.
        return pl.BlockSpec(a.shape, lambda i: (0,) * a.ndim)

    weight_specs = [resident_spec(a) for a in weight_args]

    kernel = functools.partial(_coupling_kernel, c_in, bool(reverse))

    # Footprint at the defaults (TB=512, n_hidden<=1024, bf16 weights) is
    # ~12 MiB; 48 MiB gives double-buffering headroom and stays under v7x's
    # 64 MiB physical VMEM.
    cparams = pltpu.CompilerParams(
        dimension_semantics=("parallel",),
        vmem_limit_bytes=48 * 1024 * 1024,
    )

    if not reverse:
        ldjt = jnp.reshape(ldj, (1, B)).astype(jnp.float32)
        if B_pad != B:
            ldjt = jnp.pad(ldjt, ((0, 0), (0, B_pad - B)))
        z_out, ldj_out = pl.pallas_call(
            kernel,
            grid=grid,
            in_specs=[tile_spec(c_in), resident_spec(mask_col), tile_spec(1),
                      *weight_specs],
            out_specs=(tile_spec(c_in), tile_spec(1)),
            out_shape=(jax.ShapeDtypeStruct((c_in, B_pad), jnp.float32),
                       jax.ShapeDtypeStruct((1, B_pad), jnp.float32)),
            compiler_params=cparams,
        )(zt, mask_col, ldjt, *weight_args)
        ldj_new = ldj_out[0, :B].astype(ldj.dtype)
    else:
        # ldj is unchanged in reverse: skip its DMA/store entirely.
        z_out = pl.pallas_call(
            kernel,
            grid=grid,
            in_specs=[tile_spec(c_in), resident_spec(mask_col), *weight_specs],
            out_specs=tile_spec(c_in),
            out_shape=jax.ShapeDtypeStruct((c_in, B_pad), jnp.float32),
            compiler_params=cparams,
        )(zt, mask_col, *weight_args)
        ldj_new = ldj

    z_new = jnp.transpose(z_out[:, :B]).astype(out_dtype)
    return z_new, ldj_new


def init_params(key, c_in, n_hidden):
    """Parameter init matching the PyTorch module (last Linear zeroed).

    Weights are stored in PyTorch's native (out_features, in_features) layout
    (the kernel computes W @ X); biases as (out_features, 1) columns.
    """
    k1, k2 = jax.random.split(key, 2)

    def linear(k, fan_in, fan_out):
        bound = 1.0 / jnp.sqrt(jnp.float32(fan_in))
        kw, kb = jax.random.split(k)
        w = jax.random.uniform(kw, (fan_out, fan_in), jnp.float32, -bound, bound)
        b = jax.random.uniform(kb, (fan_out, 1), jnp.float32, -bound, bound)
        return w, b

    w1, b1 = linear(k1, c_in, n_hidden)
    w2, b2 = linear(k2, n_hidden, n_hidden)
    # nn[-1].weight.data.zero_(); nn[-1].bias.data.zero_()  (fused h/t head)
    w3 = jnp.zeros((2 * c_in, n_hidden), jnp.float32)
    b3 = jnp.zeros((2 * c_in, 1), jnp.float32)
    return dict(w1=w1, b1=b1, w2=w2, b2=b2, w3=w3, b3=b3)


def coupling_reference(params, z, ldj, mask, reverse=False):
    """Plain-JAX reference of the PyTorch forward (full f32)."""
    hp = jax.lax.Precision.HIGHEST
    c_in = z.shape[1]
    mask_row = mask.reshape(1, -1)
    x = mask_row * z
    h1 = jnp.maximum(jnp.dot(x, params['w1'].T, precision=hp) + params['b1'].T, 0.0)
    h2 = jnp.maximum(jnp.dot(h1, params['w2'].T, precision=hp) + params['b2'].T, 0.0)
    y = jnp.dot(h2, params['w3'].T, precision=hp) + params['b3'].T
    log_scale = jnp.tanh(y[:, :c_in])
    t = y[:, c_in:]
    inv = 1.0 - mask_row
    if not reverse:
        z_new = mask_row * z + inv * (z * jnp.exp(log_scale) + t)
        ldj_new = ldj + jnp.sum(inv * log_scale, axis=1)
    else:
        z_new = mask_row * z + inv * (z - t) * jnp.exp(-log_scale)
        ldj_new = ldj
    return z_new, ldj_new


if __name__ == "__main__":
    # Small shapes: B deliberately not a multiple of the tile to exercise the
    # padding path; block_batch=128 gives a 2-step grid.
    B, C_IN, N_HIDDEN = 200, 4, 128

    key = jax.random.PRNGKey(0)
    k_param, k_z, k_w3, k_b3 = jax.random.split(key, 4)

    # Params exactly as the module initializes them (zeroed last layer) ...
    params = init_params(k_param, C_IN, N_HIDDEN)
    # ... plus a "trained" variant with non-zero last layer so the tanh/exp/ldj
    # math is actually exercised by the checks.
    params_t = dict(params)
    params_t['w3'] = 0.1 * jax.random.normal(k_w3, (2 * C_IN, N_HIDDEN), jnp.float32)
    params_t['b3'] = 0.1 * jax.random.normal(k_b3, (2 * C_IN, 1), jnp.float32)

    z = jax.random.normal(k_z, (B, C_IN), jnp.float32)
    ldj = jnp.zeros((B,), jnp.float32)
    mask = (jnp.arange(C_IN) % 2).astype(jnp.float32)  # alternating channel mask

    # --- f32 compute path: tight check against the plain-JAX reference ------
    for p in (params, params_t):
        z_out, ldj_out = coupling_forward(p, z, ldj, mask, reverse=False,
                                          block_batch=128,
                                          compute_dtype=jnp.float32)
        jax.block_until_ready((z_out, ldj_out))
        z_ref, ldj_ref = coupling_reference(p, z, ldj, mask, reverse=False)
        assert jnp.allclose(z_out, z_ref, atol=1e-3, rtol=1e-3), "z mismatch (f32)"
        assert jnp.allclose(ldj_out, ldj_ref, atol=1e-3, rtol=1e-3), "ldj mismatch (f32)"

        # reverse path must invert the forward transform
        z_back, _ = coupling_forward(p, z_out, ldj_out, mask, reverse=True,
                                     block_batch=128,
                                     compute_dtype=jnp.float32)
        jax.block_until_ready(z_back)
        assert jnp.allclose(z_back, z, atol=1e-4, rtol=1e-4), "inverse mismatch (f32)"

    # --- bf16-matmul (performance default) path: looser tolerance -----------
    z_out_bf, ldj_out_bf = coupling_forward(params_t, z, ldj, mask, reverse=False,
                                            block_batch=128,
                                            compute_dtype=jnp.bfloat16)
    jax.block_until_ready((z_out_bf, ldj_out_bf))
    z_ref, ldj_ref = coupling_reference(params_t, z, ldj, mask, reverse=False)
    assert jnp.allclose(z_out_bf, z_ref, atol=5e-2, rtol=5e-2), "z mismatch (bf16)"
    assert jnp.allclose(ldj_out_bf, ldj_ref, atol=5e-2, rtol=5e-2), "ldj mismatch (bf16)"

    print("KERNEL_OK")
</pallas_src>

<mosaic_0001>
module attributes {stable_mosaic.version = 11 : i64} {
  func.func @_coupling_kernel(%arg0: i32, %arg1: memref<4x128xf32, #tpu.memory_space<vmem>>, %arg2: memref<4x1xf32, #tpu.memory_space<vmem>>, %arg3: memref<1x128xf32, #tpu.memory_space<vmem>>, %arg4: memref<128x4xf32, #tpu.memory_space<vmem>>, %arg5: memref<128x1xf32, #tpu.memory_space<vmem>>, %arg6: memref<128x128xf32, #tpu.memory_space<vmem>>, %arg7: memref<128x1xf32, #tpu.memory_space<vmem>>, %arg8: memref<8x128xf32, #tpu.memory_space<vmem>>, %arg9: memref<8x1xf32, #tpu.memory_space<vmem>>, %arg10: memref<4x128xf32, #tpu.memory_space<vmem>>, %arg11: memref<1x128xf32, #tpu.memory_space<vmem>>) attributes {dimension_semantics = [#tpu.dimension_semantics<parallel>], iteration_bounds = array<i64: 2>, scalar_prefetch = 0 : i64, scratch_operands = 0 : i64, tpu.core_type = #tpu.core_type<tc>, window_params = [{transform_indices = @transform_0, window_bounds = array<i64: 4, 128>}, {pipeline_mode = #tpu.pipeline_mode<synchronous>, transform_indices = @transform_1, window_bounds = array<i64: 4, 1>}, {transform_indices = @transform_2, window_bounds = array<i64: 1, 128>}, {pipeline_mode = #tpu.pipeline_mode<synchronous>, transform_indices = @transform_3, window_bounds = array<i64: 128, 4>}, {pipeline_mode = #tpu.pipeline_mode<synchronous>, transform_indices = @transform_4, window_bounds = array<i64: 128, 1>}, {pipeline_mode = #tpu.pipeline_mode<synchronous>, transform_indices = @transform_5, window_bounds = array<i64: 128, 128>}, {pipeline_mode = #tpu.pipeline_mode<synchronous>, transform_indices = @transform_6, window_bounds = array<i64: 128, 1>}, {pipeline_mode = #tpu.pipeline_mode<synchronous>, transform_indices = @transform_7, window_bounds = array<i64: 8, 128>}, {pipeline_mode = #tpu.pipeline_mode<synchronous>, transform_indices = @transform_8, window_bounds = array<i64: 8, 1>}, {transform_indices = @transform_9, window_bounds = array<i64: 4, 128>}, {transform_indices = @transform_10, window_bounds = array<i64: 1, 128>}]} {
    %c0 = arith.constant 0 : index
    %c0_0 = arith.constant 0 : index
    %0 = vector.load %arg1[%c0, %c0_0] : memref<4x128xf32, #tpu.memory_space<vmem>>, vector<4x128xf32>
    %c0_1 = arith.constant 0 : index
    %c0_2 = arith.constant 0 : index
    %1 = vector.load %arg2[%c0_1, %c0_2] : memref<4x1xf32, #tpu.memory_space<vmem>>, vector<4x1xf32>
    %2 = vector.broadcast %1 : vector<4x1xf32> to vector<4x128xf32>
    %3 = arith.mulf %2, %0 : vector<4x128xf32>
    %c0_3 = arith.constant 0 : index
    %c0_4 = arith.constant 0 : index
    %4 = vector.load %arg4[%c0_3, %c0_4] : memref<128x4xf32, #tpu.memory_space<vmem>>, vector<128x4xf32>
    %cst = arith.constant dense<0.000000e+00> : vector<128x128xf32>
    %5 = tpu.matmul %4, %3, %cst {dimension_numbers = #tpu.dot_dimension_numbers<[1], [0], [0], [1], [0, 0, 1, 1], [], []>} : vector<128x4xf32>, vector<4x128xf32>, vector<128x128xf32> -> vector<128x128xf32>
    %c0_5 = arith.constant 0 : index
    %c0_6 = arith.constant 0 : index
    %6 = vector.load %arg5[%c0_5, %c0_6] : memref<128x1xf32, #tpu.memory_space<vmem>>, vector<128x1xf32>
    %7 = vector.broadcast %6 : vector<128x1xf32> to vector<128x128xf32>
    %8 = arith.addf %5, %7 : vector<128x128xf32>
    %cst_7 = arith.constant 0.000000e+00 : f32
    %9 = vector.broadcast %cst_7 : f32 to vector<128x128xf32>
    %10 = arith.maximumf %8, %9 : vector<128x128xf32>
    %c0_8 = arith.constant 0 : index
    %c0_9 = arith.constant 0 : index
    %11 = vector.load %arg6[%c0_8, %c0_9] : memref<128x128xf32, #tpu.memory_space<vmem>>, vector<128x128xf32>
    %cst_10 = arith.constant dense<0.000000e+00> : vector<128x128xf32>
    %12 = tpu.matmul %11, %10, %cst_10 {dimension_numbers = #tpu.dot_dimension_numbers<[1], [0], [0], [1], [0, 0, 1, 1], [], []>} : vector<128x128xf32>, vector<128x128xf32>, vector<128x128xf32> -> vector<128x128xf32>
    %c0_11 = arith.constant 0 : index
    %c0_12 = arith.constant 0 : index
    %13 = vector.load %arg7[%c0_11, %c0_12] : memref<128x1xf32, #tpu.memory_space<vmem>>, vector<128x1xf32>
    %14 = vector.broadcast %13 : vector<128x1xf32> to vector<128x128xf32>
    %15 = arith.addf %12, %14 : vector<128x128xf32>
    %cst_13 = arith.constant 0.000000e+00 : f32
    %16 = vector.broadcast %cst_13 : f32 to vector<128x128xf32>
    %17 = arith.maximumf %15, %16 : vector<128x128xf32>
    %c0_14 = arith.constant 0 : index
    %c0_15 = arith.constant 0 : index
    %18 = vector.load %arg8[%c0_14, %c0_15] : memref<8x128xf32, #tpu.memory_space<vmem>>, vector<8x128xf32>
    %cst_16 = arith.constant dense<0.000000e+00> : vector<8x128xf32>
    %19 = tpu.matmul %18, %17, %cst_16 {dimension_numbers = #tpu.dot_dimension_numbers<[1], [0], [0], [1], [0, 0, 1, 1], [], []>} : vector<8x128xf32>, vector<128x128xf32>, vector<8x128xf32> -> vector<8x128xf32>
    %c0_17 = arith.constant 0 : index
    %c0_18 = arith.constant 0 : index
    %20 = vector.load %arg9[%c0_17, %c0_18] : memref<8x1xf32, #tpu.memory_space<vmem>>, vector<8x1xf32>
    %21 = vector.broadcast %20 : vector<8x1xf32> to vector<8x128xf32>
    %22 = arith.addf %19, %21 : vector<8x128xf32>
    %23 = vector.extract_strided_slice %22 {offsets = [0, 0], sizes = [4, 128], strides = [1, 1]} : vector<8x128xf32> to vector<4x128xf32>
    %24 = math.tanh %23 : vector<4x128xf32>
    %25 = vector.extract_strided_slice %22 {offsets = [4, 0], sizes = [4, 128], strides = [1, 1]} : vector<8x128xf32> to vector<4x128xf32>
    %cst_19 = arith.constant 1.000000e+00 : f32
    %26 = vector.broadcast %cst_19 : f32 to vector<4x1xf32>
    %27 = arith.subf %26, %1 : vector<4x1xf32>
    %28 = vector.broadcast %1 : vector<4x1xf32> to vector<4x128xf32>
    %29 = arith.mulf %28, %0 : vector<4x128xf32>
    %30 = math.exp %24 : vector<4x128xf32>
    %31 = arith.mulf %0, %30 : vector<4x128xf32>
    %32 = arith.addf %31, %25 : vector<4x128xf32>
    %33 = vector.broadcast %27 : vector<4x1xf32> to vector<4x128xf32>
    %34 = arith.mulf %33, %32 : vector<4x128xf32>
    %35 = arith.addf %29, %34 : vector<4x128xf32>
    %c0_20 = arith.constant 0 : index
    %c0_21 = arith.constant 0 : index
    %36 = vector.load %arg3[%c0_20, %c0_21] : memref<1x128xf32, #tpu.memory_space<vmem>>, vector<1x128xf32>
    %37 = vector.broadcast %27 : vector<4x1xf32> to vector<4x128xf32>
    %38 = arith.mulf %37, %24 : vector<4x128xf32>
    %cst_22 = arith.constant dense<0.000000e+00> : vector<128xf32>
    %39 = vector.multi_reduction <add>, %38, %cst_22 [0] : vector<4x128xf32> to vector<128xf32>
    %40 = vector.shape_cast %39 : vector<128xf32> to vector<1x128xf32>
    %41 = arith.addf %36, %40 : vector<1x128xf32>
    %c0_23 = arith.constant 0 : index
    %c0_24 = arith.constant 0 : index
    %42 = vector.load %arg11[%c0_23, %c0_24] : memref<1x128xf32, #tpu.memory_space<vmem>>, vector<1x128xf32>
    tpu.vector_store %arg11[%c0_23, %c0_24], %41 {strides = array<i32>} : memref<1x128xf32, #tpu.memory_space<vmem>>, vector<1x128xf32>,
    %c0_25 = arith.constant 0 : index
    %c0_26 = arith.constant 0 : index
    %43 = vector.load %arg10[%c0_25, %c0_26] : memref<4x128xf32, #tpu.memory_space<vmem>>, vector<4x128xf32>
    tpu.vector_store %arg10[%c0_25, %c0_26], %35 {strides = array<i32>} : memref<4x128xf32, #tpu.memory_space<vmem>>, vector<4x128xf32>,
    return
  }
  func.func @transform_0(%arg0: i32) -> (i32, i32) {
    %c0_i32 = arith.constant 0 : i32
    %c0_i32_0 = arith.constant 0 : i32
    return %c0_i32, %arg0 : i32, i32
  }
  func.func @transform_1(%arg0: i32) -> (i32, i32) {
    %c0_i32 = arith.constant 0 : i32
    %c0_i32_0 = arith.constant 0 : i32
    %c0_i32_1 = arith.constant 0 : i32
    return %c0_i32, %c0_i32_0 : i32, i32
  }
  func.func @transform_2(%arg0: i32) -> (i32, i32) {
    %c0_i32 = arith.constant 0 : i32
    %c0_i32_0 = arith.constant 0 : i32
    return %c0_i32, %arg0 : i32, i32
  }
  func.func @transform_3(%arg0: i32) -> (i32, i32) {
    %c0_i32 = arith.constant 0 : i32
    %c0_i32_0 = arith.constant 0 : i32
    %c0_i32_1 = arith.constant 0 : i32
    return %c0_i32, %c0_i32_0 : i32, i32
  }
  func.func @transform_4(%arg0: i32) -> (i32, i32) {
    %c0_i32 = arith.constant 0 : i32
    %c0_i32_0 = arith.constant 0 : i32
    %c0_i32_1 = arith.constant 0 : i32
    return %c0_i32, %c0_i32_0 : i32, i32
  }
  func.func @transform_5(%arg0: i32) -> (i32, i32) {
    %c0_i32 = arith.constant 0 : i32
    %c0_i32_0 = arith.constant 0 : i32
    %c0_i32_1 = arith.constant 0 : i32
    return %c0_i32, %c0_i32_0 : i32, i32
  }
  func.func @transform_6(%arg0: i32) -> (i32, i32) {
    %c0_i32 = arith.constant 0 : i32
    %c0_i32_0 = arith.constant 0 : i32
    %c0_i32_1 = arith.constant 0 : i32
    return %c0_i32, %c0_i32_0 : i32, i32
  }
  func.func @transform_7(%arg0: i32) -> (i32, i32) {
    %c0_i32 = arith.constant 0 : i32
    %c0_i32_0 = arith.constant 0 : i32
    %c0_i32_1 = arith.constant 0 : i32
    return %c0_i32, %c0_i32_0 : i32, i32
  }
  func.func @transform_8(%arg0: i32) -> (i32, i32) {
    %c0_i32 = arith.constant 0 : i32
    %c0_i32_0 = arith.constant 0 : i32
    %c0_i32_1 = arith.constant 0 : i32
    return %c0_i32, %c0_i32_0 : i32, i32
  }
  func.func @transform_9(%arg0: i32) -> (i32, i32) {
    %c0_i32 = arith.constant 0 : i32
    %c0_i32_0 = arith.constant 0 : i32
    return %c0_i32, %arg0 : i32, i32
  }
  func.func @transform_10(%arg0: i32) -> (i32, i32) {
    %c0_i32 = arith.constant 0 : i32
    %c0_i32_0 = arith.constant 0 : i32
    return %c0_i32, %arg0 : i32, i32
  }
}

</mosaic_0001>

<llo_original>
// kernel: tpu_custom_call.1
$region0: #{tpu_custom_call.1}
  #allocation0 [shape = 'u32[]', space=smem, size = 0x4, offset = 0x4, fixed_abs, tag = 'smem constant byte address 0x4 - core index']
  #allocation1 [shape = 'u32[144,128]{1,0:T(1,128)}', space=vmem, size = 0x12000, scoped, tag = 'internal scratch']
  %s0 = inlined_call_operand.vmem [shape: f32[4,256], index: 0, kind: input, shape index: {}]
  %s1 = inlined_call_operand.vmem [shape: f32[4,1], index: 1, kind: input, shape index: {}]
  %s2 = inlined_call_operand.vmem [shape: f32[1,256], index: 2, kind: input, shape index: {}]
  %s3 = inlined_call_operand.vmem [shape: f32[128,4], index: 3, kind: input, shape index: {}]
  %s4 = inlined_call_operand.vmem [shape: f32[128,1], index: 4, kind: input, shape index: {}]
  %s5 = inlined_call_operand.vmem [shape: f32[128,128], index: 5, kind: input, shape index: {}]
  %s6 = inlined_call_operand.vmem [shape: f32[128,1], index: 6, kind: input, shape index: {}]
  %s7 = inlined_call_operand.vmem [shape: f32[8,128], index: 7, kind: input, shape index: {}]
  %s8 = inlined_call_operand.vmem [shape: f32[8,1], index: 8, kind: input, shape index: {}]
  %s9 = inlined_call_operand.hbm [shape: f32[4,256], index: 9, kind: output, shape index: {0}]
  %s10 = inlined_call_operand.hbm [shape: f32[1,256], index: 10, kind: output, shape index: {1}]
  %11 = xla_tuple %s9, %s10
  %s12 = sld [smem:[#allocation0]]
  $region77: #{tpu_custom_call.1} parent=0
    _
  %s14 = ssub.s32 1, %s12
  %s15 = scalar_select 0, %s14, %s12
  $region1: #{tpu_custom_call.1} parent=0
    #allocation2 [shape = 'u8[4096]{0}', space=vmem, size = 0x1000, scoped, tag = 'output window, operand 0']
    #allocation3 [shape = 's32[2]{0}', space=sflag, size = 0x8, scoped, tag = 'scoped memory for tpu_custom_call.1']
    #allocation4 [shape = 'u8[1024]{0}', space=vmem, size = 0x400, scoped, tag = 'output window, operand 1']
    #allocation5 [shape = 's32[2]{0}', space=sflag, size = 0x8, scoped, tag = 'scoped memory for tpu_custom_call.1']
    %16 = vsyncpa [#allocation3], 0
    %s17 = scalar_lea.sflag [#allocation3], 1
    %18 = vsyncpa %s17, 0
    %19 = vsyncpa [#allocation5], 0
    %s20 = scalar_lea.sflag [#allocation5], 1
    %21 = vsyncpa %s20, 0
    loop: start=0, step=1, limit=4
    $region2: #{tpu_custom_call.1} parent=1 // loop_pre_header
      _
    $region3: #{tpu_custom_call.1} parent=1 // loop_header
      %s23 = sphi 0, %s27
      %p24 = scmp.ge.s32.totalorder %s23, 4
      %s33 = sphi 0, %s35
      %s36 = sphi 0, %s33
      %s37 = sphi 0, %s36
      %s53 = sphi 0, %s37
      %s57 = sphi 0, %s57
      %s59 = sphi 0, %s57
      %s60 = sphi 0, %s59
      %s74 = sphi 0, %s60
      %s80 = sphi 0, %s82
      %s83 = sphi 0, %s80
      %s84 = sphi 0, %s83
      %s100 = sphi 0, %s84
      %s104 = sphi 0, %s104
      %s106 = sphi 0, %s104
      %s107 = sphi 0, %s106
      %s121 = sphi 0, %s107
      %s125 = sphi 0, %s125
      %s127 = sphi 0, %s125
      %s128 = sphi 0, %s127
      %s142 = sphi 0, %s128
      %s146 = sphi 0, %s146
      %s148 = sphi 0, %s146
      %s149 = sphi 0, %s148
      %s163 = sphi 0, %s149
      %s167 = sphi 0, %s167
      %s169 = sphi 0, %s167
      %s170 = sphi 0, %s169
      %s184 = sphi 0, %s170
      %s188 = sphi 0, %s188
      %s190 = sphi 0, %s188
      %s191 = sphi 0, %s190
      %s205 = sphi 0, %s191
      %s209 = sphi 0, %s209
      %s211 = sphi 0, %s209
      %s212 = sphi 0, %s211
      %s226 = sphi 0, %s212
      %s232 = sphi 0, %s234
      %s235 = sphi 0, %s232
      %s236 = sphi 0, %s235
      %s252 = sphi 0, %s236
      %s258 = sphi 0, %s260
      %s261 = sphi 0, %s258
      %s262 = sphi 0, %s261
      %s278 = sphi 0, %s262
    $region4: #{tpu_custom_call.1} parent=1 // loop_header_branch
      %26 = sbr.rel (%p24) target = $region8
    $region5: #{tpu_custom_call.1} parent=1 // loop_body
      %s28 = ssub.s32 %s23, 1
      %s29 = ssub.s32 %s23, 2
      %s30 = sadd.s32 %s23, 1
      %s31 = ssub.s32 %s23, %s30
      %p32 = scmp.eq.s32.totalorder %s31, 0
      %s34 = sadd.s32 %s33, 1
      %s35 = scalar_select %p32, %s33, %s34
      %p38 = pneg %p32
      %p39 = scmp.eq.s32.totalorder %s23, 1
      %p40 = por %p38, %p39
      %p41 = scmp.ne.s32.totalorder %s33, %s36
      %p42 = scmp.eq.s32.totalorder %s23, 0
      %p43 = por %p41, %p42
      %p44 = scmp.ne.s32.totalorder %s33, %s36
      %p45 = scmp.eq.s32.totalorder %s28, 1
      %p46 = por %p44, %p45
      %p47 = scmp.ne.s32.totalorder %s36, %s37
      %p48 = scmp.eq.s32.totalorder %s28, 0
      %p49 = por %p47, %p48
      %p50 = scmp.ne.s32.totalorder %s36, %s37
      %p51 = scmp.eq.s32.totalorder %s29, 1
      %p52 = por %p50, %p51
      %p54 = scmp.ne.s32.totalorder %s37, %s53
      %p55 = scmp.eq.s32.totalorder %s29, 0
      %p56 = por %p54, %p55
      %s58 = sadd.s32 %s57, 1
      %p61 = scmp.eq.s32.totalorder %s23, 1
      %p62 = scmp.ne.s32.totalorder %s57, %s59
      %p63 = scmp.eq.s32.totalorder %s23, 0
      %p64 = por %p62, %p63
      %p65 = scmp.ne.s32.totalorder %s57, %s59
      %p66 = scmp.eq.s32.totalorder %s28, 1
      %p67 = por %p65, %p66
      %p68 = scmp.ne.s32.totalorder %s59, %s60
      %p69 = scmp.eq.s32.totalorder %s28, 0
      %p70 = por %p68, %p69
      %p71 = scmp.ne.s32.totalorder %s59, %s60
      %p72 = scmp.eq.s32.totalorder %s29, 1
      %p73 = por %p71, %p72
      %p75 = scmp.ne.s32.totalorder %s60, %s74
      %p76 = scmp.eq.s32.totalorder %s29, 0
      %p77 = por %p75, %p76
      %s78 = ssub.s32 %s23, %s30
      %p79 = scmp.eq.s32.totalorder %s78, 0
      %s81 = sadd.s32 %s80, 1
      %s82 = scalar_select %p79, %s80, %s81
      %p85 = pneg %p79
      %p86 = scmp.eq.s32.totalorder %s23, 1
      %p87 = por %p85, %p86
      %p88 = scmp.ne.s32.totalorder %s80, %s83
      %p89 = scmp.eq.s32.totalorder %s23, 0
      %p90 = por %p88, %p89
      %p91 = scmp.ne.s32.totalorder %s80, %s83
      %p92 = scmp.eq.s32.totalorder %s28, 1
      %p93 = por %p91, %p92
      %p94 = scmp.ne.s32.totalorder %s83, %s84
      %p95 = scmp.eq.s32.totalorder %s28, 0
      %p96 = por %p94, %p95
      %p97 = scmp.ne.s32.totalorder %s83, %s84
      %p98 = scmp.eq.s32.totalorder %s29, 1
      %p99 = por %p97, %p98
      %p101 = scmp.ne.s32.totalorder %s84, %s100
      %p102 = scmp.eq.s32.totalorder %s29, 0
      %p103 = por %p101, %p102
      %s105 = sadd.s32 %s104, 1
      %p108 = scmp.eq.s32.totalorder %s23, 1
      %p109 = scmp.ne.s32.totalorder %s104, %s106
      %p110 = scmp.eq.s32.totalorder %s23, 0
      %p111 = por %p109, %p110
      %p112 = scmp.ne.s32.totalorder %s104, %s106
      %p113 = scmp.eq.s32.totalorder %s28, 1
      %p114 = por %p112, %p113
      %p115 = scmp.ne.s32.totalorder %s106, %s107
      %p116 = scmp.eq.s32.totalorder %s28, 0
      %p117 = por %p115, %p116
      %p118 = scmp.ne.s32.totalorder %s106, %s107
      %p119 = scmp.eq.s32.totalorder %s29, 1
      %p120 = por %p118, %p119
      %p122 = scmp.ne.s32.totalorder %s107, %s121
      %p123 = scmp.eq.s32.totalorder %s29, 0
      %p124 = por %p122, %p123
      %s126 = sadd.s32 %s125, 1
      %p129 = scmp.eq.s32.totalorder %s23, 1
      %p130 = scmp.ne.s32.totalorder %s125, %s127
      %p131 = scmp.eq.s32.totalorder %s23, 0
      %p132 = por %p130, %p131
      %p133 = scmp.ne.s32.totalorder %s125, %s127
      %p134 = scmp.eq.s32.totalorder %s28, 1
      %p135 = por %p133, %p134
      %p136 = scmp.ne.s32.totalorder %s127, %s128
      %p137 = scmp.eq.s32.totalorder %s28, 0
      %p138 = por %p136, %p137
      %p139 = scmp.ne.s32.totalorder %s127, %s128
      %p140 = scmp.eq.s32.totalorder %s29, 1
      %p141 = por %p139, %p140
      %p143 = scmp.ne.s32.totalorder %s128, %s142
      %p144 = scmp.eq.s32.totalorder %s29, 0
      %p145 = por %p143, %p144
      %s147 = sadd.s32 %s146, 1
      %p150 = scmp.eq.s32.totalorder %s23, 1
      %p151 = scmp.ne.s32.totalorder %s146, %s148
      %p152 = scmp.eq.s32.totalorder %s23, 0
      %p153 = por %p151, %p152
      %p154 = scmp.ne.s32.totalorder %s146, %s148
      %p155 = scmp.eq.s32.totalorder %s28, 1
      %p156 = por %p154, %p155
      %p157 = scmp.ne.s32.totalorder %s148, %s149
      %p158 = scmp.eq.s32.totalorder %s28, 0
      %p159 = por %p157, %p158
      %p160 = scmp.ne.s32.totalorder %s148, %s149
      %p161 = scmp.eq.s32.totalorder %s29, 1
      %p162 = por %p160, %p161
      %p164 = scmp.ne.s32.totalorder %s149, %s163
      %p165 = scmp.eq.s32.totalorder %s29, 0
      %p166 = por %p164, %p165
      %s168 = sadd.s32 %s167, 1
      %p171 = scmp.eq.s32.totalorder %s23, 1
      %p172 = scmp.ne.s32.totalorder %s167, %s169
      %p173 = scmp.eq.s32.totalorder %s23, 0
      %p174 = por %p172, %p173
      %p175 = scmp.ne.s32.totalorder %s167, %s169
      %p176 = scmp.eq.s32.totalorder %s28, 1
      %p177 = por %p175, %p176
      %p178 = scmp.ne.s32.totalorder %s169, %s170
      %p179 = scmp.eq.s32.totalorder %s28, 0
      %p180 = por %p178, %p179
      %p181 = scmp.ne.s32.totalorder %s169, %s170
      %p182 = scmp.eq.s32.totalorder %s29, 1
      %p183 = por %p181, %p182
      %p185 = scmp.ne.s32.totalorder %s170, %s184
      %p186 = scmp.eq.s32.totalorder %s29, 0
      %p187 = por %p185, %p186
      %s189 = sadd.s32 %s188, 1
      %p192 = scmp.eq.s32.totalorder %s23, 1
      %p193 = scmp.ne.s32.totalorder %s188, %s190
      %p194 = scmp.eq.s32.totalorder %s23, 0
      %p195 = por %p193, %p194
      %p196 = scmp.ne.s32.totalorder %s188, %s190
      %p197 = scmp.eq.s32.totalorder %s28, 1
      %p198 = por %p196, %p197
      %p199 = scmp.ne.s32.totalorder %s190, %s191
      %p200 = scmp.eq.s32.totalorder %s28, 0
      %p201 = por %p199, %p200
      %p202 = scmp.ne.s32.totalorder %s190, %s191
      %p203 = scmp.eq.s32.totalorder %s29, 1
      %p204 = por %p202, %p203
      %p206 = scmp.ne.s32.totalorder %s191, %s205
      %p207 = scmp.eq.s32.totalorder %s29, 0
      %p208 = por %p206, %p207
      %s210 = sadd.s32 %s209, 1
      %p213 = scmp.eq.s32.totalorder %s23, 1
      %p214 = scmp.ne.s32.totalorder %s209, %s211
      %p215 = scmp.eq.s32.totalorder %s23, 0
      %p216 = por %p214, %p215
      %p217 = scmp.ne.s32.totalorder %s209, %s211
      %p218 = scmp.eq.s32.totalorder %s28, 1
      %p219 = por %p217, %p218
      %p220 = scmp.ne.s32.totalorder %s211, %s212
      %p221 = scmp.eq.s32.totalorder %s28, 0
      %p222 = por %p220, %p221
      %p223 = scmp.ne.s32.totalorder %s211, %s212
      %p224 = scmp.eq.s32.totalorder %s29, 1
      %p225 = por %p223, %p224
      %p227 = scmp.ne.s32.totalorder %s212, %s226
      %p228 = scmp.eq.s32.totalorder %s29, 0
      %p229 = por %p227, %p228
      %s230 = ssub.s32 %s23, %s30
      %p231 = scmp.eq.s32.totalorder %s230, 0
      %s233 = sadd.s32 %s232, 1
      %s234 = scalar_select %p231, %s232, %s233
      %p237 = pneg %p231
      %p238 = scmp.eq.s32.totalorder %s23, 1
      %p239 = por %p237, %p238
      %p240 = scmp.ne.s32.totalorder %s232, %s235
      %p241 = scmp.eq.s32.totalorder %s23, 0
      %p242 = por %p240, %p241
      %p243 = scmp.ne.s32.totalorder %s232, %s235
      %p244 = scmp.eq.s32.totalorder %s28, 1
      %p245 = por %p243, %p244
      %p246 = scmp.ne.s32.totalorder %s235, %s236
      %p247 = scmp.eq.s32.totalorder %s28, 0
      %p248 = por %p246, %p247
      %p249 = scmp.ne.s32.totalorder %s235, %s236
      %p250 = scmp.eq.s32.totalorder %s29, 1
      %p251 = por %p249, %p250
      %p253 = scmp.ne.s32.totalorder %s236, %s252
      %p254 = scmp.eq.s32.totalorder %s29, 0
      %p255 = por %p253, %p254
      %s256 = ssub.s32 %s23, %s30
      %p257 = scmp.eq.s32.totalorder %s256, 0
      %s259 = sadd.s32 %s258, 1
      %s260 = scalar_select %p257, %s258, %s259
      %p263 = pneg %p257
      %p264 = scmp.eq.s32.totalorder %s23, 1
      %p265 = por %p263, %p264
      %p266 = scmp.ne.s32.totalorder %s258, %s261
      %p267 = scmp.eq.s32.totalorder %s23, 0
      %p268 = por %p266, %p267
      %p269 = scmp.ne.s32.totalorder %s258, %s261
      %p270 = scmp.eq.s32.totalorder %s28, 1
      %p271 = por %p269, %p270
      %p272 = scmp.ne.s32.totalorder %s261, %s262
      %p273 = scmp.eq.s32.totalorder %s28, 0
      %p274 = por %p272, %p273
      %p275 = scmp.ne.s32.totalorder %s261, %s262
      %p276 = scmp.eq.s32.totalorder %s29, 1
      %p277 = por %p275, %p276
      %p279 = scmp.ne.s32.totalorder %s262, %s278
      %p280 = scmp.eq.s32.totalorder %s29, 0
      %p281 = por %p279, %p280
      %p282 = scmp.le.s32.totalorder 1, %s23
      %p283 = scmp.lt.s32.totalorder %s23, 3
      %p284 = pnand %p282, %p283
      %p285 = pneg %p284
      // Predicated region
      $region9: #{tpu_custom_call.1} parent=5 // pred_check
        _
      $region10: #{tpu_custom_call.1} parent=5 // pred_check_branch
        %287 = sbr.rel (%p284) target = $region12
      $region11: #{tpu_custom_call.1} parent=5 // pred_region
        %s288 = ssub.s32 %s23, 1
        // Predicated region
        $region13: #{tpu_custom_call.1} parent=11 // pred_check
          %p289 = pneg %p70
        $region14: #{tpu_custom_call.1} parent=11 // pred_check_branch
          %291 = sbr.rel (%p289) target = $region16
        $region15: #{tpu_custom_call.1} parent=11 // pred_region
          _
        $region16: #{tpu_custom_call.1} parent=11 // pred_fallthru
          _
        // Predicated region
        $region17: #{tpu_custom_call.1} parent=11 // pred_check
          %p292 = pneg %p117
        $region18: #{tpu_custom_call.1} parent=11 // pred_check_branch
          %294 = sbr.rel (%p292) target = $region20
        $region19: #{tpu_custom_call.1} parent=11 // pred_region
          _
        $region20: #{tpu_custom_call.1} parent=11 // pred_fallthru
          _
        // Predicated region
        $region21: #{tpu_custom_call.1} parent=11 // pred_check
          %p295 = pneg %p138
        $region22: #{tpu_custom_call.1} parent=11 // pred_check_branch
          %297 = sbr.rel (%p295) target = $region24
        $region23: #{tpu_custom_call.1} parent=11 // pred_region
          _
        $region24: #{tpu_custom_call.1} parent=11 // pred_fallthru
          _
        // Predicated region
        $region25: #{tpu_custom_call.1} parent=11 // pred_check
          %p298 = pneg %p159
        $region26: #{tpu_custom_call.1} parent=11 // pred_check_branch
          %300 = sbr.rel (%p298) target = $region28
        $region27: #{tpu_custom_call.1} parent=11 // pred_region
          _
        $region28: #{tpu_custom_call.1} parent=11 // pred_fallthru
          _
        // Predicated region
        $region29: #{tpu_custom_call.1} parent=11 // pred_check
          %p301 = pneg %p180
        $region30: #{tpu_custom_call.1} parent=11 // pred_check_branch
          %303 = sbr.rel (%p301) target = $region32
        $region31: #{tpu_custom_call.1} parent=11 // pred_region
          _
        $region32: #{tpu_custom_call.1} parent=11 // pred_fallthru
          _
        // Predicated region
        $region33: #{tpu_custom_call.1} parent=11 // pred_check
          %p304 = pneg %p201
        $region34: #{tpu_custom_call.1} parent=11 // pred_check_branch
          %306 = sbr.rel (%p304) target = $region36
        $region35: #{tpu_custom_call.1} parent=11 // pred_region
          _
        $region36: #{tpu_custom_call.1} parent=11 // pred_fallthru
          _
        // Predicated region
        $region37: #{tpu_custom_call.1} parent=11 // pred_check
          %p307 = pneg %p222
        $region38: #{tpu_custom_call.1} parent=11 // pred_check_branch
          %309 = sbr.rel (%p307) target = $region40
        $region39: #{tpu_custom_call.1} parent=11 // pred_region
          _
        $region40: #{tpu_custom_call.1} parent=11 // pred_fallthru
          _
      $region12: #{tpu_custom_call.1} parent=5 // pred_fallthru
        _
      %p310 = scmp.lt.s32.totalorder %s23, 2
      // Predicated region
      $region41: #{tpu_custom_call.1} parent=5 // pred_check
        %p311 = pneg %p310
      $region42: #{tpu_custom_call.1} parent=5 // pred_check_branch
        %313 = sbr.rel (%p311) target = $region44
      $region43: #{tpu_custom_call.1} parent=5 // pred_region
        // Predicated region
        $region45: #{tpu_custom_call.1} parent=43 // pred_check
          %p314 = pneg %p43
        $region46: #{tpu_custom_call.1} parent=43 // pred_check_branch
          %316 = sbr.rel (%p314) target = $region48
        $region47: #{tpu_custom_call.1} parent=43 // pred_region
          %p317 = scmp.lt.s32.totalorder %s23, 1
          %s318 = scalar_select %p317, %s23, 1
          %s319 = smul.addr %s318, 4
          %s320 = scalar_lea.vmem %s0, %s319
        $region48: #{tpu_custom_call.1} parent=43 // pred_fallthru
          _
        // Predicated region
        $region49: #{tpu_custom_call.1} parent=43 // pred_check
          %p321 = pneg %p90
        $region50: #{tpu_custom_call.1} parent=43 // pred_check_branch
          %323 = sbr.rel (%p321) target = $region52
        $region51: #{tpu_custom_call.1} parent=43 // pred_region
          %p324 = scmp.lt.s32.totalorder %s23, 1
          %s325 = scalar_select %p324, %s23, 1
          %s326 = scalar_lea.vmem %s2, %s325
        $region52: #{tpu_custom_call.1} parent=43 // pred_fallthru
          _
      $region44: #{tpu_custom_call.1} parent=5 // pred_fallthru
        _
      %p327 = scmp.le.s32.totalorder 1, %s23
      %p328 = scmp.lt.s32.totalorder %s23, 3
      %p329 = pnand %p327, %p328
      %p330 = pneg %p329
      // Predicated region
      $region53: #{tpu_custom_call.1} parent=5 // pred_check
        _
      $region54: #{tpu_custom_call.1} parent=5 // pred_check_branch
        %332 = sbr.rel (%p329) target = $region56
      $region55: #{tpu_custom_call.1} parent=5 // pred_region
        %s333 = ssub.s32 %s23, 1
        %p334 = scmp.lt.s32.totalorder %s28, 1
        %s335 = scalar_select %p334, %s28, 1
        %s336 = smul.addr %s335, 4
        %s337 = scalar_lea.vmem %s0, %s336
        %p338 = pneg %p49
        %p339 = pneg %p46
        %p340 = pneg %p70
        %p341 = pneg %p67
        %p342 = scmp.lt.s32.totalorder %s28, 1
        %s343 = scalar_select %p342, %s28, 1
        %s344 = scalar_lea.vmem %s2, %s343
        %p345 = pneg %p96
        %p346 = pneg %p93
        %p347 = pneg %p117
        %p348 = pneg %p114
        %p349 = pneg %p138
        %p350 = pneg %p135
        %p351 = pneg %p159
        %p352 = pneg %p156
        %p353 = pneg %p180
        %p354 = pneg %p177
        %p355 = pneg %p201
        %p356 = pneg %p198
        %p357 = pneg %p222
        %p358 = pneg %p219
        %p359 = pneg %p248
        %p360 = pneg %p245
        %s361 = sand.u32 %s235, 1
        %s362 = scalar_lea.sflag [#allocation3], %s361
        %s363 = sand.u32 %s235, 1
        %s364 = smul.addr %s363, 4
        %s365 = scalar_lea.vmem [#allocation2], %s364
        %p366 = pneg %p274
        %p367 = pneg %p271
        %s368 = sand.u32 %s261, 1
        %s369 = scalar_lea.sflag [#allocation5], %s368
        %s370 = sand.u32 %s261, 1
        %s371 = scalar_lea.vmem [#allocation4], %s370
        %p372 = scmp.lt.s32.totalorder %s28, 1
        %s373 = scalar_select %p372, %s28, 1
        %s374 = smul.addr %s373, 4
        %s375 = scalar_lea.vmem %s0, %s374
        %p376 = scmp.lt.s32.totalorder %s28, 1
        %s377 = scalar_select %p376, %s28, 1
        %s378 = scalar_lea.vmem %s2, %s377
        %v379 = vld [vmem:[%s375] sm:$0xf]
        %v380 = vld [vmem:[%s1] sm:$0xf]
        %382 = vset.pattern.permute.xlu0 0
        %383 = vperm.xlu0 %382, %v380
        %v384 = vpop.permute.xlu0 %383
        %v386 = vmul.f32 %v384, %v379
        %v387 = vld [vmem:[%s3] sm:$0xff]
        %v388 = vld [vmem:[%s3 + $0x8] sm:$0xff]
        %v389 = vld [vmem:[%s3 + $0x10] sm:$0xff]
        %v390 = vld [vmem:[%s3 + $0x18] sm:$0xff]
        %v391 = vld [vmem:[%s3 + $0x20] sm:$0xff]
        %v392 = vld [vmem:[%s3 + $0x28] sm:$0xff]
        %v393 = vld [vmem:[%s3 + $0x30] sm:$0xff]
        %v394 = vld [vmem:[%s3 + $0x38] sm:$0xff]
        %v395 = vld [vmem:[%s3 + $0x40] sm:$0xff]
        %v396 = vld [vmem:[%s3 + $0x48] sm:$0xff]
        %v397 = vld [vmem:[%s3 + $0x50] sm:$0xff]
        %v398 = vld [vmem:[%s3 + $0x58] sm:$0xff]
        %v399 = vld [vmem:[%s3 + $0x60] sm:$0xff]
        %v400 = vld [vmem:[%s3 + $0x68] sm:$0xff]
        %v401 = vld [vmem:[%s3 + $0x70] sm:$0xff]
        %v402 = vld [vmem:[%s3 + $0x78] sm:$0xff]
        %v403 = vld [vmem:[%s4] sm:$0xff]
        %v404 = vld [vmem:[%s4 + $0x8] sm:$0xff]
        %v405 = vld [vmem:[%s4 + $0x10] sm:$0xff]
        %v406 = vld [vmem:[%s4 + $0x18] sm:$0xff]
        %v407 = vld [vmem:[%s4 + $0x20] sm:$0xff]
        %v408 = vld [vmem:[%s4 + $0x28] sm:$0xff]
        %v409 = vld [vmem:[%s4 + $0x30] sm:$0xff]
        %v410 = vld [vmem:[%s4 + $0x38] sm:$0xff]
        %v411 = vld [vmem:[%s4 + $0x40] sm:$0xff]
        %v412 = vld [vmem:[%s4 + $0x48] sm:$0xff]
        %v413 = vld [vmem:[%s4 + $0x50] sm:$0xff]
        %v414 = vld [vmem:[%s4 + $0x58] sm:$0xff]
        %v415 = vld [vmem:[%s4 + $0x60] sm:$0xff]
        %v416 = vld [vmem:[%s4 + $0x68] sm:$0xff]
        %v417 = vld [vmem:[%s4 + $0x70] sm:$0xff]
        %v418 = vld [vmem:[%s4 + $0x78] sm:$0xff]
        %420 = vset.pattern.permute.xlu0 0
        %421 = vperm.xlu0 %420, %v403
        %v422 = vpop.permute.xlu0 %421
        %425 = vset.pattern.permute.xlu0 0
        %426 = vperm.xlu0 %425, %v404
        %v427 = vpop.permute.xlu0 %426
        %430 = vset.pattern.permute.xlu0 0
        %431 = vperm.xlu0 %430, %v405
        %v432 = vpop.permute.xlu0 %431
        %435 = vset.pattern.permute.xlu0 0
        %436 = vperm.xlu0 %435, %v406
        %v437 = vpop.permute.xlu0 %436
        %440 = vset.pattern.permute.xlu0 0
        %441 = vperm.xlu0 %440, %v407
        %v442 = vpop.permute.xlu0 %441
        %445 = vset.pattern.permute.xlu0 0
        %446 = vperm.xlu0 %445, %v408
        %v447 = vpop.permute.xlu0 %446
        %450 = vset.pattern.permute.xlu0 0
        %451 = vperm.xlu0 %450, %v409
        %v452 = vpop.permute.xlu0 %451
        %455 = vset.pattern.permute.xlu0 0
        %456 = vperm.xlu0 %455, %v410
        %v457 = vpop.permute.xlu0 %456
        %460 = vset.pattern.permute.xlu0 0
        %461 = vperm.xlu0 %460, %v411
        %v462 = vpop.permute.xlu0 %461
        %465 = vset.pattern.permute.xlu0 0
        %466 = vperm.xlu0 %465, %v412
        %v467 = vpop.permute.xlu0 %466
        %470 = vset.pattern.permute.xlu0 0
        %471 = vperm.xlu0 %470, %v413
        %v472 = vpop.permute.xlu0 %471
        %475 = vset.pattern.permute.xlu0 0
        %476 = vperm.xlu0 %475, %v414
        %v477 = vpop.permute.xlu0 %476
        %480 = vset.pattern.permute.xlu0 0
        %481 = vperm.xlu0 %480, %v415
        %v482 = vpop.permute.xlu0 %481
        %485 = vset.pattern.permute.xlu0 0
        %486 = vperm.xlu0 %485, %v416
        %v487 = vpop.permute.xlu0 %486
        %490 = vset.pattern.permute.xlu0 0
        %491 = vperm.xlu0 %490, %v417
        %v492 = vpop.permute.xlu0 %491
        %495 = vset.pattern.permute.xlu0 0
        %496 = vperm.xlu0 %495, %v418
        %v497 = vpop.permute.xlu0 %496
        %vm499 = vcmask 31744
        %v501 = vsel %vm499, %v387, 0
        %v504 = vsel %vm499, %v388, 0
        %v507 = vsel %vm499, %v389, 0
        %v510 = vsel %vm499, %v390, 0
        %v513 = vsel %vm499, %v391, 0
        %v516 = vsel %vm499, %v392, 0
        %v519 = vsel %vm499, %v393, 0
        %v522 = vsel %vm499, %v394, 0
        %v525 = vsel %vm499, %v395, 0
        %v528 = vsel %vm499, %v396, 0
        %v531 = vsel %vm499, %v397, 0
        %v534 = vsel %vm499, %v398, 0
        %v537 = vsel %vm499, %v399, 0
        %v540 = vsel %vm499, %v400, 0
        %v543 = vsel %vm499, %v401, 0
        %v546 = vsel %vm499, %v402, 0
        %vm548 = vcmask 1043456
        %v550 = vsel %vm548, %v386, 0
        %552 = vmatprep.subr.mxu0 0.0
        %553 = vmatpush1.msra.mxu0 0.0
        %554 = vmatprep.subr.mxu0 0.0
        %555 = vmatpush1.msra.mxu0 0.0
        %556 = vmatprep.subr.mxu0 0.0
        %557 = vmatpush1.msra.mxu0 0.0
        %558 = vmatprep.subr.mxu0 0.0
        %559 = vmatpush1.msra.mxu0 0.0
        %560 = vmatprep.subr.mxu0 0.0
        %561 = vmatpush1.msra.mxu0 0.0
        %562 = vmatprep.subr.mxu0 0.0
        %563 = vmatpush1.msra.mxu0 0.0
        %564 = vmatprep.subr.mxu0 0.0
        %565 = vmatpush1.msra.mxu0 0.0
        %566 = vmatprep.subr.mxu0 0.0
        %567 = vmatpush1.msra.mxu0 0.0
        %568 = vmatprep.subr.mxu0 0.0
        %569 = vmatpush1.msra.mxu0 0.0
        %570 = vmatprep.subr.mxu0 0.0
        %571 = vmatpush1.msra.mxu0 0.0
        %572 = vmatprep.subr.mxu0 0.0
        %573 = vmatpush1.msra.mxu0 0.0
        %574 = vmatprep.subr.mxu0 0.0
        %575 = vmatpush1.msra.mxu0 0.0
        %576 = vmatprep.subr.mxu0 0.0
        %577 = vmatpush1.msra.mxu0 0.0
        %578 = vmatprep.subr.mxu0 0.0
        %579 = vmatpush1.msra.mxu0 0.0
        %580 = vmatprep.subr.mxu0 0.0
        %581 = vmatpush1.msra.mxu0 0.0
        %582 = vmatprep.subr.mxu0 0.0
        %583 = vmatpush1.msra.mxu0 %v550
        %584 = vmatprep.subr.mxu0 0.0
        %585 = vmatpush2.msra.mxu0 0.0
        %586 = vmatprep.subr.mxu0 0.0
        %587 = vmatpush2.msra.mxu0 0.0
        %588 = vmatprep.subr.mxu0 0.0
        %589 = vmatpush2.msra.mxu0 0.0
        %590 = vmatprep.subr.mxu0 0.0
        %591 = vmatpush2.msra.mxu0 0.0
        %592 = vmatprep.subr.mxu0 0.0
        %593 = vmatpush2.msra.mxu0 0.0
        %594 = vmatprep.subr.mxu0 0.0
        %595 = vmatpush2.msra.mxu0 0.0
        %596 = vmatprep.subr.mxu0 0.0
        %597 = vmatpush2.msra.mxu0 0.0
        %598 = vmatprep.subr.mxu0 0.0
        %599 = vmatpush2.msra.mxu0 0.0
        %600 = vmatprep.subr.mxu0 0.0
        %601 = vmatpush2.msra.mxu0 0.0
        %602 = vmatprep.subr.mxu0 0.0
        %603 = vmatpush2.msra.mxu0 0.0
        %604 = vmatprep.subr.mxu0 0.0
        %605 = vmatpush2.msra.mxu0 0.0
        %606 = vmatprep.subr.mxu0 0.0
        %607 = vmatpush2.msra.mxu0 0.0
        %608 = vmatprep.subr.mxu0 0.0
        %609 = vmatpush2.msra.mxu0 0.0
        %610 = vmatprep.subr.mxu0 0.0
        %611 = vmatpush2.msra.mxu0 0.0
        %612 = vmatprep.subr.mxu0 0.0
        %613 = vmatpush2.msra.mxu0 0.0
        %614 = vmatprep.subr.mxu0 0.0
        %615 = vmatpush2.msra.mxu0 0.0
        %616 = vmatprep.mubr.f32.mxu0 0.0
        %617 = vmatmul.mubr.f32.gmra.mxu0 %v501
        %v618 = vpop.f32.mrf.mxu0
        %v619 = vadd.f32 %v422, %v618
        %v620 = vpop.f32.mrf.mxu0
        %621 = vmatprep.mubr.f32.mxu0 0.0
        %622 = vmatmul.mubr.f32.gmra.mxu0 %v504
        %v623 = vpop.f32.mrf.mxu0
        %v624 = vadd.f32 %v427, %v623
        %v625 = vpop.f32.mrf.mxu0
        %626 = vmatprep.mubr.f32.mxu0 0.0
        %627 = vmatmul.mubr.f32.gmra.mxu0 %v507
        %v628 = vpop.f32.mrf.mxu0
        %v629 = vadd.f32 %v432, %v628
        %v630 = vpop.f32.mrf.mxu0
        %631 = vmatprep.mubr.f32.mxu0 0.0
        %632 = vmatmul.mubr.f32.gmra.mxu0 %v510
        %v633 = vpop.f32.mrf.mxu0
        %v634 = vadd.f32 %v437, %v633
        %v635 = vpop.f32.mrf.mxu0
        %636 = vmatprep.mubr.f32.mxu0 0.0
        %637 = vmatmul.mubr.f32.gmra.mxu0 %v513
        %v638 = vpop.f32.mrf.mxu0
        %v639 = vadd.f32 %v442, %v638
        %v640 = vpop.f32.mrf.mxu0
        %641 = vmatprep.mubr.f32.mxu0 0.0
        %642 = vmatmul.mubr.f32.gmra.mxu0 %v516
        %v643 = vpop.f32.mrf.mxu0
        %v644 = vadd.f32 %v447, %v643
        %v645 = vpop.f32.mrf.mxu0
        %646 = vmatprep.mubr.f32.mxu0 0.0
        %647 = vmatmul.mubr.f32.gmra.mxu0 %v519
        %v648 = vpop.f32.mrf.mxu0
        %v649 = vadd.f32 %v452, %v648
        %v650 = vpop.f32.mrf.mxu0
        %651 = vmatprep.mubr.f32.mxu0 0.0
        %652 = vmatmul.mubr.f32.gmra.mxu0 %v522
        %v653 = vpop.f32.mrf.mxu0
        %v654 = vadd.f32 %v457, %v653
        %v655 = vpop.f32.mrf.mxu0
        %656 = vmatprep.mubr.f32.mxu0 0.0
        %657 = vmatmul.mubr.f32.gmra.mxu0 %v525
        %v658 = vpop.f32.mrf.mxu0
        %v659 = vadd.f32 %v462, %v658
        %v660 = vpop.f32.mrf.mxu0
        %661 = vmatprep.mubr.f32.mxu0 0.0
        %662 = vmatmul.mubr.f32.gmra.mxu0 %v528
        %v663 = vpop.f32.mrf.mxu0
        %v664 = vadd.f32 %v467, %v663
        %v665 = vpop.f32.mrf.mxu0
        %666 = vmatprep.mubr.f32.mxu0 0.0
        %667 = vmatmul.mubr.f32.gmra.mxu0 %v531
        %v668 = vpop.f32.mrf.mxu0
        %v669 = vadd.f32 %v472, %v668
        %v670 = vpop.f32.mrf.mxu0
        %671 = vmatprep.mubr.f32.mxu0 0.0
        %672 = vmatmul.mubr.f32.gmra.mxu0 %v534
        %v673 = vpop.f32.mrf.mxu0
        %v674 = vadd.f32 %v477, %v673
        %v675 = vpop.f32.mrf.mxu0
        %676 = vmatprep.mubr.f32.mxu0 0.0
        %677 = vmatmul.mubr.f32.gmra.mxu0 %v537
        %v678 = vpop.f32.mrf.mxu0
        %v679 = vadd.f32 %v482, %v678
        %v680 = vpop.f32.mrf.mxu0
        %681 = vmatprep.mubr.f32.mxu0 0.0
        %682 = vmatmul.mubr.f32.gmra.mxu0 %v540
        %v683 = vpop.f32.mrf.mxu0
        %v684 = vadd.f32 %v487, %v683
        %v685 = vpop.f32.mrf.mxu0
        %686 = vmatprep.mubr.f32.mxu0 0.0
        %687 = vmatmul.mubr.f32.gmra.mxu0 %v543
        %v688 = vpop.f32.mrf.mxu0
        %v689 = vadd.f32 %v492, %v688
        %v690 = vpop.f32.mrf.mxu0
        %691 = vmatprep.mubr.f32.mxu0 0.0
        %692 = vmatmul.mubr.f32.gmra.mxu0 %v546
        %v693 = vpop.f32.mrf.mxu0
        %v694 = vadd.f32 %v497, %v693
        %v695 = vpop.f32.mrf.mxu0
        %696 = vdwg.mxu0
        %v697 = vmax.f32 %v619, 0.0
        %v698 = vmax.f32 %v624, 0.0
        %v699 = vmax.f32 %v629, 0.0
        %v700 = vmax.f32 %v634, 0.0
        %v701 = vmax.f32 %v639, 0.0
        %v702 = vmax.f32 %v644, 0.0
        %v703 = vmax.f32 %v649, 0.0
        %v704 = vmax.f32 %v654, 0.0
        %v705 = vmax.f32 %v659, 0.0
        %v706 = vmax.f32 %v664, 0.0
        %v707 = vmax.f32 %v669, 0.0
        %v708 = vmax.f32 %v674, 0.0
        %v709 = vmax.f32 %v679, 0.0
        %v710 = vmax.f32 %v684, 0.0
        %v711 = vmax.f32 %v689, 0.0
        %v712 = vmax.f32 %v694, 0.0
        %v713 = vld [vmem:[%s5] sm:$0xff]
        %v714 = vld [vmem:[%s5 + $0x8] sm:$0xff]
        %v715 = vld [vmem:[%s5 + $0x10] sm:$0xff]
        %v716 = vld [vmem:[%s5 + $0x18] sm:$0xff]
        %v717 = vld [vmem:[%s5 + $0x20] sm:$0xff]
        %v718 = vld [vmem:[%s5 + $0x28] sm:$0xff]
        %v719 = vld [vmem:[%s5 + $0x30] sm:$0xff]
        %v720 = vld [vmem:[%s5 + $0x38] sm:$0xff]
        %v721 = vld [vmem:[%s5 + $0x40] sm:$0xff]
        %v722 = vld [vmem:[%s5 + $0x48] sm:$0xff]
        %v723 = vld [vmem:[%s5 + $0x50] sm:$0xff]
        %v724 = vld [vmem:[%s5 + $0x58] sm:$0xff]
        %v725 = vld [vmem:[%s5 + $0x60] sm:$0xff]
        %v726 = vld [vmem:[%s5 + $0x68] sm:$0xff]
        %v727 = vld [vmem:[%s5 + $0x70] sm:$0xff]
        %v728 = vld [vmem:[%s5 + $0x78] sm:$0xff]
        %v729 = vld [vmem:[%s6] sm:$0xff]
        %v730 = vld [vmem:[%s6 + $0x8] sm:$0xff]
        %v731 = vld [vmem:[%s6 + $0x10] sm:$0xff]
        %v732 = vld [vmem:[%s6 + $0x18] sm:$0xff]
        %v733 = vld [vmem:[%s6 + $0x20] sm:$0xff]
        %v734 = vld [vmem:[%s6 + $0x28] sm:$0xff]
        %v735 = vld [vmem:[%s6 + $0x30] sm:$0xff]
        %v736 = vld [vmem:[%s6 + $0x38] sm:$0xff]
        %v737 = vld [vmem:[%s6 + $0x40] sm:$0xff]
        %v738 = vld [vmem:[%s6 + $0x48] sm:$0xff]
        %v739 = vld [vmem:[%s6 + $0x50] sm:$0xff]
        %v740 = vld [vmem:[%s6 + $0x58] sm:$0xff]
        %v741 = vld [vmem:[%s6 + $0x60] sm:$0xff]
        %v742 = vld [vmem:[%s6 + $0x68] sm:$0xff]
        %v743 = vld [vmem:[%s6 + $0x70] sm:$0xff]
        %v744 = vld [vmem:[%s6 + $0x78] sm:$0xff]
        %746 = vset.pattern.permute.xlu0 0
        %747 = vperm.xlu0 %746, %v729
        %v748 = vpop.permute.xlu0 %747
        %751 = vset.pattern.permute.xlu0 0
        %752 = vperm.xlu0 %751, %v730
        %v753 = vpop.permute.xlu0 %752
        %756 = vset.pattern.permute.xlu0 0
        %757 = vperm.xlu0 %756, %v731
        %v758 = vpop.permute.xlu0 %757
        %761 = vset.pattern.permute.xlu0 0
        %762 = vperm.xlu0 %761, %v732
        %v763 = vpop.permute.xlu0 %762
        %766 = vset.pattern.permute.xlu0 0
        %767 = vperm.xlu0 %766, %v733
        %v768 = vpop.permute.xlu0 %767
        %771 = vset.pattern.permute.xlu0 0
        %772 = vperm.xlu0 %771, %v734
        %v773 = vpop.permute.xlu0 %772
        %776 = vset.pattern.permute.xlu0 0
        %777 = vperm.xlu0 %776, %v735
        %v778 = vpop.permute.xlu0 %777
        %781 = vset.pattern.permute.xlu0 0
        %782 = vperm.xlu0 %781, %v736
        %v783 = vpop.permute.xlu0 %782
        %786 = vset.pattern.permute.xlu0 0
        %787 = vperm.xlu0 %786, %v737
        %v788 = vpop.permute.xlu0 %787
        %791 = vset.pattern.permute.xlu0 0
        %792 = vperm.xlu0 %791, %v738
        %v793 = vpop.permute.xlu0 %792
        %796 = vset.pattern.permute.xlu0 0
        %797 = vperm.xlu0 %796, %v739
        %v798 = vpop.permute.xlu0 %797
        %801 = vset.pattern.permute.xlu0 0
        %802 = vperm.xlu0 %801, %v740
        %v803 = vpop.permute.xlu0 %802
        %806 = vset.pattern.permute.xlu0 0
        %807 = vperm.xlu0 %806, %v741
        %v808 = vpop.permute.xlu0 %807
        %811 = vset.pattern.permute.xlu0 0
        %812 = vperm.xlu0 %811, %v742
        %v813 = vpop.permute.xlu0 %812
        %816 = vset.pattern.permute.xlu0 0
        %817 = vperm.xlu0 %816, %v743
        %v818 = vpop.permute.xlu0 %817
        %821 = vset.pattern.permute.xlu0 0
        %822 = vperm.xlu0 %821, %v744
        %v823 = vpop.permute.xlu0 %822
        %825 = vmatprep.subr.mxu0 0.0
        %826 = vmatpush1.msra.mxu0 %v712
        %827 = vmatprep.subr.mxu0 0.0
        %828 = vmatpush1.msra.mxu0 %v711
        %829 = vmatprep.subr.mxu0 0.0
        %830 = vmatpush1.msra.mxu0 %v710
        %831 = vmatprep.subr.mxu0 0.0
        %832 = vmatpush1.msra.mxu0 %v709
        %833 = vmatprep.subr.mxu0 0.0
        %834 = vmatpush1.msra.mxu0 %v708
        %835 = vmatprep.subr.mxu0 0.0
        %836 = vmatpush1.msra.mxu0 %v707
        %837 = vmatprep.subr.mxu0 0.0
        %838 = vmatpush1.msra.mxu0 %v706
        %839 = vmatprep.subr.mxu0 0.0
        %840 = vmatpush1.msra.mxu0 %v705
        %841 = vmatprep.subr.mxu0 0.0
        %842 = vmatpush1.msra.mxu0 %v704
        %843 = vmatprep.subr.mxu0 0.0
        %844 = vmatpush1.msra.mxu0 %v703
        %845 = vmatprep.subr.mxu0 0.0
        %846 = vmatpush1.msra.mxu0 %v702
        %847 = vmatprep.subr.mxu0 0.0
        %848 = vmatpush1.msra.mxu0 %v701
        %849 = vmatprep.subr.mxu0 0.0
        %850 = vmatpush1.msra.mxu0 %v700
        %851 = vmatprep.subr.mxu0 0.0
        %852 = vmatpush1.msra.mxu0 %v699
        %853 = vmatprep.subr.mxu0 0.0
        %854 = vmatpush1.msra.mxu0 %v698
        %855 = vmatprep.subr.mxu0 0.0
        %856 = vmatpush1.msra.mxu0 %v697
        %857 = vmatprep.subr.mxu0 0.0
        %858 = vmatpush2.msra.mxu0 0.0
        %859 = vmatprep.subr.mxu0 0.0
        %860 = vmatpush2.msra.mxu0 0.0
        %861 = vmatprep.subr.mxu0 0.0
        %862 = vmatpush2.msra.mxu0 0.0
        %863 = vmatprep.subr.mxu0 0.0
        %864 = vmatpush2.msra.mxu0 0.0
        %865 = vmatprep.subr.mxu0 0.0
        %866 = vmatpush2.msra.mxu0 0.0
        %867 = vmatprep.subr.mxu0 0.0
        %868 = vmatpush2.msra.mxu0 0.0
        %869 = vmatprep.subr.mxu0 0.0
        %870 = vmatpush2.msra.mxu0 0.0
        %871 = vmatprep.subr.mxu0 0.0
        %872 = vmatpush2.msra.mxu0 0.0
        %873 = vmatprep.subr.mxu0 0.0
        %874 = vmatpush2.msra.mxu0 0.0
        %875 = vmatprep.subr.mxu0 0.0
        %876 = vmatpush2.msra.mxu0 0.0
        %877 = vmatprep.subr.mxu0 0.0
        %878 = vmatpush2.msra.mxu0 0.0
        %879 = vmatprep.subr.mxu0 0.0
        %880 = vmatpush2.msra.mxu0 0.0
        %881 = vmatprep.subr.mxu0 0.0
        %882 = vmatpush2.msra.mxu0 0.0
        %883 = vmatprep.subr.mxu0 0.0
        %884 = vmatpush2.msra.mxu0 0.0
        %885 = vmatprep.subr.mxu0 0.0
        %886 = vmatpush2.msra.mxu0 0.0
        %887 = vmatprep.subr.mxu0 0.0
        %888 = vmatpush2.msra.mxu0 0.0
        %889 = vmatprep.mubr.f32.mxu0 0.0
        %890 = vmatmul.mubr.f32.gmra.mxu0 %v713
        %v891 = vpop.f32.mrf.mxu0
        %v892 = vadd.f32 %v748, %v891
        %v893 = vpop.f32.mrf.mxu0
        %894 = vmatprep.mubr.f32.mxu0 0.0
        %895 = vmatmul.mubr.f32.gmra.mxu0 %v714
        %v896 = vpop.f32.mrf.mxu0
        %v897 = vadd.f32 %v753, %v896
        %v898 = vpop.f32.mrf.mxu0
        %899 = vmatprep.mubr.f32.mxu0 0.0
        %900 = vmatmul.mubr.f32.gmra.mxu0 %v715
        %v901 = vpop.f32.mrf.mxu0
        %v902 = vadd.f32 %v758, %v901
        %v903 = vpop.f32.mrf.mxu0
        %904 = vmatprep.mubr.f32.mxu0 0.0
        %905 = vmatmul.mubr.f32.gmra.mxu0 %v716
        %v906 = vpop.f32.mrf.mxu0
        %v907 = vadd.f32 %v763, %v906
        %v908 = vpop.f32.mrf.mxu0
        %909 = vmatprep.mubr.f32.mxu0 0.0
        %910 = vmatmul.mubr.f32.gmra.mxu0 %v717
        %v911 = vpop.f32.mrf.mxu0
        %v912 = vadd.f32 %v768, %v911
        %v913 = vpop.f32.mrf.mxu0
        %914 = vmatprep.mubr.f32.mxu0 0.0
        %915 = vmatmul.mubr.f32.gmra.mxu0 %v718
        %v916 = vpop.f32.mrf.mxu0
        %v917 = vadd.f32 %v773, %v916
        %v918 = vpop.f32.mrf.mxu0
        %919 = vmatprep.mubr.f32.mxu0 0.0
        %920 = vmatmul.mubr.f32.gmra.mxu0 %v719
        %v921 = vpop.f32.mrf.mxu0
        %v922 = vadd.f32 %v778, %v921
        %v923 = vpop.f32.mrf.mxu0
        %924 = vmatprep.mubr.f32.mxu0 0.0
        %925 = vmatmul.mubr.f32.gmra.mxu0 %v720
        %v926 = vpop.f32.mrf.mxu0
        %v927 = vadd.f32 %v783, %v926
        %v928 = vpop.f32.mrf.mxu0
        %929 = vmatprep.mubr.f32.mxu0 0.0
        %930 = vmatmul.mubr.f32.gmra.mxu0 %v721
        %v931 = vpop.f32.mrf.mxu0
        %v932 = vadd.f32 %v788, %v931
        %v933 = vpop.f32.mrf.mxu0
        %934 = vmatprep.mubr.f32.mxu0 0.0
        %935 = vmatmul.mubr.f32.gmra.mxu0 %v722
        %v936 = vpop.f32.mrf.mxu0
        %v937 = vadd.f32 %v793, %v936
        %v938 = vpop.f32.mrf.mxu0
        %939 = vmatprep.mubr.f32.mxu0 0.0
        %940 = vmatmul.mubr.f32.gmra.mxu0 %v723
        %v941 = vpop.f32.mrf.mxu0
        %v942 = vadd.f32 %v798, %v941
        %v943 = vpop.f32.mrf.mxu0
        %944 = vmatprep.mubr.f32.mxu0 0.0
        %945 = vmatmul.mubr.f32.gmra.mxu0 %v724
        %v946 = vpop.f32.mrf.mxu0
        %v947 = vadd.f32 %v803, %v946
        %v948 = vpop.f32.mrf.mxu0
        %949 = vmatprep.mubr.f32.mxu0 0.0
        %950 = vmatmul.mubr.f32.gmra.mxu0 %v725
        %v951 = vpop.f32.mrf.mxu0
        %v952 = vadd.f32 %v808, %v951
        %v953 = vpop.f32.mrf.mxu0
        %954 = vmatprep.mubr.f32.mxu0 0.0
        %955 = vmatmul.mubr.f32.gmra.mxu0 %v726
        %v956 = vpop.f32.mrf.mxu0
        %v957 = vadd.f32 %v813, %v956
        %v958 = vpop.f32.mrf.mxu0
        %959 = vmatprep.mubr.f32.mxu0 0.0
        %960 = vmatmul.mubr.f32.gmra.mxu0 %v727
        %v961 = vpop.f32.mrf.mxu0
        %v962 = vadd.f32 %v818, %v961
        %v963 = vpop.f32.mrf.mxu0
        %964 = vmatprep.mubr.f32.mxu0 0.0
        %965 = vmatmul.mubr.f32.gmra.mxu0 %v728
        %v966 = vpop.f32.mrf.mxu0
        %v967 = vadd.f32 %v823, %v966
        %v968 = vpop.f32.mrf.mxu0
        %969 = vdwg.mxu0
        %v970 = vmax.f32 %v892, 0.0
        %v971 = vmax.f32 %v897, 0.0
        %v972 = vmax.f32 %v902, 0.0
        %v973 = vmax.f32 %v907, 0.0
        %v974 = vmax.f32 %v912, 0.0
        %v975 = vmax.f32 %v917, 0.0
        %v976 = vmax.f32 %v922, 0.0
        %v977 = vmax.f32 %v927, 0.0
        %v978 = vmax.f32 %v932, 0.0
        %v979 = vmax.f32 %v937, 0.0
        %v980 = vmax.f32 %v942, 0.0
        %v981 = vmax.f32 %v947, 0.0
        %v982 = vmax.f32 %v952, 0.0
        %v983 = vmax.f32 %v957, 0.0
        %v984 = vmax.f32 %v962, 0.0
        %v985 = vmax.f32 %v967, 0.0
        %v986 = vld [vmem:[%s7] sm:$0xff]
        %v987 = vld [vmem:[%s8] sm:$0xff]
        %989 = vset.pattern.permute.xlu0 0
        %990 = vperm.xlu0 %989, %v987
        %v991 = vpop.permute.xlu0 %990
        %993 = vmatprep.subr.mxu0 0.0
        %994 = vmatpush1.msra.mxu0 %v985
        %995 = vmatprep.subr.mxu0 0.0
        %996 = vmatpush1.msra.mxu0 %v984
        %997 = vmatprep.subr.mxu0 0.0
        %998 = vmatpush1.msra.mxu0 %v983
        %999 = vmatprep.subr.mxu0 0.0
        %1000 = vmatpush1.msra.mxu0 %v982
        %1001 = vmatprep.subr.mxu0 0.0
        %1002 = vmatpush1.msra.mxu0 %v981
        %1003 = vmatprep.subr.mxu0 0.0
        %1004 = vmatpush1.msra.mxu0 %v980
        %1005 = vmatprep.subr.mxu0 0.0
        %1006 = vmatpush1.msra.mxu0 %v979
        %1007 = vmatprep.subr.mxu0 0.0
        %1008 = vmatpush1.msra.mxu0 %v978
        %1009 = vmatprep.subr.mxu0 0.0
        %1010 = vmatpush1.msra.mxu0 %v977
        %1011 = vmatprep.subr.mxu0 0.0
        %1012 = vmatpush1.msra.mxu0 %v976
        %1013 = vmatprep.subr.mxu0 0.0
        %1014 = vmatpush1.msra.mxu0 %v975
        %1015 = vmatprep.subr.mxu0 0.0
        %1016 = vmatpush1.msra.mxu0 %v974
        %1017 = vmatprep.subr.mxu0 0.0
        %1018 = vmatpush1.msra.mxu0 %v973
        %1019 = vmatprep.subr.mxu0 0.0
        %1020 = vmatpush1.msra.mxu0 %v972
        %1021 = vmatprep.subr.mxu0 0.0
        %1022 = vmatpush1.msra.mxu0 %v971
        %1023 = vmatprep.subr.mxu0 0.0
        %1024 = vmatpush1.msra.mxu0 %v970
        %1025 = vmatprep.subr.mxu0 0.0
        %1026 = vmatpush2.msra.mxu0 0.0
        %1027 = vmatprep.subr.mxu0 0.0
        %1028 = vmatpush2.msra.mxu0 0.0
        %1029 = vmatprep.subr.mxu0 0.0
        %1030 = vmatpush2.msra.mxu0 0.0
        %1031 = vmatprep.subr.mxu0 0.0
        %1032 = vmatpush2.msra.mxu0 0.0
        %1033 = vmatprep.subr.mxu0 0.0
        %1034 = vmatpush2.msra.mxu0 0.0
        %1035 = vmatprep.subr.mxu0 0.0
        %1036 = vmatpush2.msra.mxu0 0.0
        %1037 = vmatprep.subr.mxu0 0.0
        %1038 = vmatpush2.msra.mxu0 0.0
        %1039 = vmatprep.subr.mxu0 0.0
        %1040 = vmatpush2.msra.mxu0 0.0
        %1041 = vmatprep.subr.mxu0 0.0
        %1042 = vmatpush2.msra.mxu0 0.0
        %1043 = vmatprep.subr.mxu0 0.0
        %1044 = vmatpush2.msra.mxu0 0.0
        %1045 = vmatprep.subr.mxu0 0.0
        %1046 = vmatpush2.msra.mxu0 0.0
        %1047 = vmatprep.subr.mxu0 0.0
        %1048 = vmatpush2.msra.mxu0 0.0
        %1049 = vmatprep.subr.mxu0 0.0
        %1050 = vmatpush2.msra.mxu0 0.0
        %1051 = vmatprep.subr.mxu0 0.0
        %1052 = vmatpush2.msra.mxu0 0.0
        %1053 = vmatprep.subr.mxu0 0.0
        %1054 = vmatpush2.msra.mxu0 0.0
        %1055 = vmatprep.subr.mxu0 0.0
        %1056 = vmatpush2.msra.mxu0 0.0
        %1057 = vmatprep.mubr.f32.mxu0 0.0
        %1058 = vmatmul.mubr.f32.gmra.mxu0 %v986
        %v1059 = vpop.f32.mrf.mxu0
        %v1060 = vadd.f32 %v991, %v1059
        %v1061 = vpop.f32.mrf.mxu0
        %1062 = vdwg.mxu0
        %v1063 = vtanh.pop %v1060
        %v1064 = vsub.f32 1.0, %v380
        %v1065 = vmul.f32 %v1063, 1.442695
        %v1066 = vpow.pop %v1065
        %v1067 = vmul.f32 %v379, %v1066
        %v1069 = vrot.slane %v1060, 4
        %v1071 = vadd.f32 %v1067, %v1069
        %1073 = vset.pattern.permute.xlu0 0
        %1074 = vperm.xlu0 %1073, %v1064
        %v1075 = vpop.permute.xlu0 %1074
        %v1077 = vmul.f32 %v1075, %v1071
        %v1078 = vadd.f32 %v386, %v1077
        %v1079 = vld [vmem:[%s378] sm:$0x1]
        %v1080 = vmul.f32 %v1075, %v1063
        %v1081 = vsel %vm548, %v1080, 0.0
        %v1082 = vrot.slane %v1081, 4
        %v1083 = vadd.f32 %v1081, %v1082
        %v1084 = vrot.slane %v1083, 2
        %v1085 = vadd.f32 %v1083, %v1084
        %v1086 = vrot.slane %v1085, 1
        %v1087 = vadd.f32 %v1085, %v1086
        %v1088 = vadd.f32 %v1079, %v1087
        %1089 = vst [vmem:[%s371] sm:$0x1] %v1088
        %1090 = vst [vmem:[%s365] sm:$0xf] %v1078
        %s1091 = sand.u32 %s235, 1
        %s1092 = scalar_lea.sflag [#allocation3], %s1091
        %s1093 = sand.u32 %s235, 1
        %s1094 = smul.addr %s1093, 4
        %s1095 = scalar_lea.vmem [#allocation2], %s1094
        %s1096 = sand.u32 %s261, 1
        %s1097 = scalar_lea.sflag [#allocation5], %s1096
        %s1098 = sand.u32 %s261, 1
        %s1099 = scalar_lea.vmem [#allocation4], %s1098
        // Predicated region
        $region57: #{tpu_custom_call.1} parent=55 // pred_check
          %p1100 = pneg %p245
        $region58: #{tpu_custom_call.1} parent=55 // pred_check_branch
          %1102 = sbr.rel (%p1100) target = $region60
        $region59: #{tpu_custom_call.1} parent=55 // pred_region
          %s1104 = ssub.s32 64, 64
          %1105 = vsyncadd %s1092, %s1104
          %s1106 = smul.addr %s28, 64
          %s1107 = scalar_lea.hbm %s9, %s1106
          %s1109 = sshll.u32 %s1095, 4
          %s1110 = int_to_ptr.vmem [resolvable:$true] %s1109
          %1112 = dma.vmem_to_hbm [thread:$0]  %s1110, 64, %s1107, %s1092
        $region60: #{tpu_custom_call.1} parent=55 // pred_fallthru
          _
        // Predicated region
        $region61: #{tpu_custom_call.1} parent=55 // pred_check
          %p1113 = pneg %p271
        $region62: #{tpu_custom_call.1} parent=55 // pred_check_branch
          %1115 = sbr.rel (%p1113) target = $region64
        $region63: #{tpu_custom_call.1} parent=55 // pred_region
          %s1117 = ssub.s32 16, 16
          %1118 = vsyncadd %s1097, %s1117
          %s1119 = smul.addr %s28, 16
          %s1120 = scalar_lea.hbm %s10, %s1119
          %s1122 = sshll.u32 %s1099, 4
          %s1123 = int_to_ptr.vmem [resolvable:$true] %s1122
          %1125 = dma.vmem_to_hbm [thread:$0]  %s1123, 16, %s1120, %s1097
        $region64: #{tpu_custom_call.1} parent=55 // pred_fallthru
          _
      $region56: #{tpu_custom_call.1} parent=5 // pred_fallthru
        _
      %p1126 = scmp.le.s32.totalorder 2, %s23
      // Predicated region
      $region65: #{tpu_custom_call.1} parent=5 // pred_check
        %p1127 = pneg %p1126
      $region66: #{tpu_custom_call.1} parent=5 // pred_check_branch
        %1129 = sbr.rel (%p1127) target = $region68
      $region67: #{tpu_custom_call.1} parent=5 // pred_region
        %s1130 = ssub.s32 %s23, 2
        // Predicated region
        $region69: #{tpu_custom_call.1} parent=67 // pred_check
          %p1131 = pneg %p251
        $region70: #{tpu_custom_call.1} parent=67 // pred_check_branch
          %1133 = sbr.rel (%p1131) target = $region72
        $region71: #{tpu_custom_call.1} parent=67 // pred_region
          %s1134 = sand.u32 %s236, 1
          %s1135 = scalar_lea.sflag [#allocation3], %s1134
          %s1136 = sand.u32 %s236, 1
          %s1137 = smul.addr %s1136, 4
          %s1138 = scalar_lea.vmem [#allocation2], %s1137
          %1139 = dma.done %s1135, 64
        $region72: #{tpu_custom_call.1} parent=67 // pred_fallthru
          _
        // Predicated region
        $region73: #{tpu_custom_call.1} parent=67 // pred_check
          %p1140 = pneg %p277
        $region74: #{tpu_custom_call.1} parent=67 // pred_check_branch
          %1142 = sbr.rel (%p1140) target = $region76
        $region75: #{tpu_custom_call.1} parent=67 // pred_region
          %s1143 = sand.u32 %s262, 1
          %s1144 = scalar_lea.sflag [#allocation5], %s1143
          %s1145 = sand.u32 %s262, 1
          %s1146 = scalar_lea.vmem [#allocation4], %s1145
          %1147 = dma.done %s1144, 16
        $region76: #{tpu_custom_call.1} parent=67 // pred_fallthru
          _
      $region68: #{tpu_custom_call.1} parent=5 // pred_fallthru
        _
    $region6: #{tpu_custom_call.1} parent=1 // loop_footer
      %s27 = sadd.s32 1, %s23
    $region7: #{tpu_custom_call.1} parent=1 // loop_footer_branch
      %22 = sbr.rel target = $region3
    $region8: #{tpu_custom_call.1} parent=1 // loop_exit
      _
    %1148 = vsyncpa [#allocation3], 1
    %s1149 = scalar_lea.sflag [#allocation3], 1
    %1150 = vsyncpa %s1149, 1
    %1151 = vsyncpa [#allocation5], 1
    %s1152 = scalar_lea.sflag [#allocation5], 1
    %1153 = vsyncpa %s1152, 1

</llo_original>
